<compile_context>
chip_gen: v6e
topology: v6e:2x2x1
jax: 0.10.0
libtpu: 0.0.40
codegen_flags: <defaults>
</compile_context>

<pallas_src>
import functools

import jax
import jax.numpy as jnp
from jax.experimental import pallas as pl
from jax.experimental.pallas import tpu as pltpu


# ---------------------------------------------------------------------------
# helpers
# ---------------------------------------------------------------------------
def _round_up(x, m):
    return (x + m - 1) // m * m


def _cdiv(a, b):
    return (a + b - 1) // b


def _vmem_capacity_bytes():
    try:
        cap = getattr(pltpu.get_tpu_info(), "vmem_capacity_bytes", None)
        if cap:
            return int(cap)
    except Exception:
        pass
    return 64 * 1024 * 1024          # conservative fallback (v7x per-core VMEM)


def _pick_tile_hw(hw, c, itemsize, *, stream_budget, n_big_streams=3):
    """Lane-dense spatial tile (multiple of 128) sized so the double-buffered big
    streams (r1 + r2 + out blocks) plus the (1,1,T) attention map fit inside
    `stream_budget` bytes of VMEM."""
    hwp = _round_up(hw, 128)
    per_col = (2 * n_big_streams * c + 4) * itemsize    # bytes per spatial column
    t = stream_budget // max(per_col, 1)
    t = (min(t, hwp) // 128) * 128
    return max(128, min(t, hwp))


# ---------------------------------------------------------------------------
# K1: cmax = max over channels of (r1 * r2)
# ---------------------------------------------------------------------------
def _mul_chanmax_kernel(r1_ref, r2_ref, cmax_ref):
    cmax_ref[...] = jnp.max(r1_ref[...] * r2_ref[...], axis=1, keepdims=True)


# ---------------------------------------------------------------------------
# K2: SpatialAttention: 7x7 zero-padded conv (no bias) + sigmoid on the (B,H,W)
#     map.  Per-batch grid bounds VMEM (v7x) and the 7 W-direction (lane) shifts
#     are hoisted out of the tap loop and reused across the 7 row offsets.
#     TODO(synk): for very large single-image maps, additionally tile H with a
#     (K-1)-row halo in the index_map.
# ---------------------------------------------------------------------------
def _spatial_attn_kernel(xpad_ref, w_ref, sa_ref, *, H, W, K):
    xp = xpad_ref[...]                                   # (1, H+K-1, W+K-1)
    cols = [xp[:, :, dj:dj + W] for dj in range(K)]      # K lane shifts, hoisted
    acc = jnp.zeros(sa_ref.shape, jnp.float32)           # (1, H, W)
    for di in range(K):
        for dj in range(K):
            acc = acc + w_ref[di, dj] * cols[dj][:, di:di + H, :]
    sa_ref[...] = jax.nn.sigmoid(acc).astype(sa_ref.dtype)


# ---------------------------------------------------------------------------
# K3: per-(batch, chunk) running spatial max of r_f = r1 + (r1*r2)*sa.
#     The resident (1, C, 1) output block is the accumulator (native layout of
#     the lane-axis reduction).  The -inf tail mask is only emitted when the
#     spatial size is not a multiple of the tile (masked=True).
# ---------------------------------------------------------------------------
def _rf_partial_max_kernel(r1_ref, r2_ref, sa_ref, pmax_ref, *,
                           hw, tile_hw, tiles_per_chunk, num_tiles, masked):
    k = pl.program_id(2)

    @pl.when(k == 0)
    def _():
        pmax_ref[...] = jnp.full_like(pmax_ref, -jnp.inf)

    r1 = r1_ref[...]                                     # (1, C, T)
    r_f = r1 + (r1 * r2_ref[...]) * sa_ref[...]          # sa (1,1,T) broadcasts over C

    if masked:  # only when HW % T != 0: mask the out-of-range tail columns
        g = jnp.minimum(pl.program_id(1) * tiles_per_chunk + k, num_tiles - 1)
        col = jax.lax.broadcasted_iota(jnp.int32, r_f.shape, 2) + g * tile_hw
        r_f = jnp.where(col < hw, r_f, -jnp.inf)

    pmax_ref[...] = jnp.maximum(pmax_ref[...],
                                jnp.max(r_f, axis=2, keepdims=True))


# ---------------------------------------------------------------------------
# K3b: combine chunk maxes + ChannelAttention FC chain (tiny, single block)
# ---------------------------------------------------------------------------
def _chan_fc_kernel(pmax_ref, w1t_ref, w2t_ref, ca_ref):
    pooled = jnp.max(pmax_ref[...], axis=1)                              # (B, C)
    h = jnp.maximum(jnp.dot(pooled, w1t_ref[...],
                            preferred_element_type=jnp.float32), 0.0)    # (B, Ch)
    ca = jnp.dot(h, w2t_ref[...], preferred_element_type=jnp.float32)    # (B, C)
    ca_ref[...] = jax.nn.sigmoid(ca)


# ---------------------------------------------------------------------------
# K4: r_out = r_f * r_ca + r1   (r_f recomputed on the fly)
# ---------------------------------------------------------------------------
def _combine_kernel(r1_ref, r2_ref, sa_ref, ca_ref, out_ref):
    r1 = r1_ref[...]
    r_f = r1 + (r1 * r2_ref[...]) * sa_ref[...]
    out_ref[...] = (r_f * ca_ref[...] + r1).astype(out_ref.dtype)


# ---------------------------------------------------------------------------
# wrapper
# ---------------------------------------------------------------------------
def rfem_forward(r1, r2, ca_fc1_w, ca_fc2_w, sa_conv_w, *, tile_hw=None):
    """RFEM forward (channels1 == channels2 path).

    r1, r2:     (B, C, H, W) float32, NCHW
    ca_fc1_w:   (C//16, C)   ChannelAttention fc1 1x1-conv weight (squeezed)
    ca_fc2_w:   (C, C//16)   ChannelAttention fc2 1x1-conv weight (squeezed)
    sa_conv_w:  (7, 7)       SpatialAttention conv weight (squeezed)
    """
    # TODO(synk): channels1 != channels2 branch (UpsamplingBilinear2d + DepthWiseConv
    # + BatchNorm + ReLU "rgb_context") is not implemented in Pallas.
    assert r1.shape == r2.shape, "only the channels1 == channels2 branch is implemented"

    B, C, H, W = r1.shape
    HW = H * W
    K = sa_conv_w.shape[0]
    P = K // 2
    dtype = r1.dtype
    itemsize = jnp.dtype(dtype).itemsize

    # ---- generation-aware VMEM budget / tile sizing --------------------------------
    cap = _vmem_capacity_bytes()                        # 128 MiB v5e/v6e, 64 MiB v7x
    vmem_limit = min(cap * 3 // 4, 96 * 1024 * 1024)    # explicit scoped-VMEM limit
    stream_budget = min(int(vmem_limit * 0.6), 48 * 1024 * 1024)

    if tile_hw is None:
        T = _pick_tile_hw(HW, C, itemsize, stream_budget=stream_budget)
        if B == 1:
            # keep >= 2 spatial tiles so both TensorCores (v7x) get work
            T = max(128, min(T, _round_up(_cdiv(HW, 2), 128)))
    else:
        assert tile_hw % 128 == 0, "tile_hw must be a multiple of 128 (lane-dense)"
        T = tile_hw

    num_tiles = _cdiv(HW, T)
    pad = num_tiles * T - HW                            # handled in-kernel, no jnp.pad

    # flattened metadata-only views of the big tensors (no HBM copies)
    r1f = r1.reshape(B, C, HW)
    r2f = r2.reshape(B, C, HW)

    def _cp(sem):
        return pltpu.CompilerParams(dimension_semantics=sem,
                                    vmem_limit_bytes=vmem_limit)

    big2 = pl.BlockSpec((1, C, T), lambda b, k: (b, 0, k))
    map2 = pl.BlockSpec((1, 1, T), lambda b, k: (b, 0, k))

    # ---- K1: channel-max of mul_fuse -------------------------------------------------
    cmax = pl.pallas_call(
        _mul_chanmax_kernel,
        out_shape=jax.ShapeDtypeStruct((B, 1, HW), dtype),
        grid=(B, num_tiles),
        in_specs=[big2, big2],
        out_specs=map2,
        compiler_params=_cp(("parallel", "parallel")),
    )(r1f, r2f)

    # ---- K2: SpatialAttention (7x7 conv + sigmoid on the tiny (B,H,W) map) -----------
    xpad = jnp.pad(cmax.reshape(B, H, W), ((0, 0), (P, P), (P, P)))   # small map only
    sa_map = pl.pallas_call(
        functools.partial(_spatial_attn_kernel, H=H, W=W, K=K),
        out_shape=jax.ShapeDtypeStruct((B, H, W), dtype),
        grid=(B,),
        in_specs=[pl.BlockSpec((1, H + 2 * P, W + 2 * P), lambda b: (b, 0, 0)),
                  pl.BlockSpec(memory_space=pltpu.MemorySpace.SMEM)],
        out_specs=pl.BlockSpec((1, H, W), lambda b: (b, 0, 0)),
        compiler_params=_cp(("parallel",)),
    )(xpad, sa_conv_w)
    saf = sa_map.reshape(B, 1, HW)

    # ---- K3: streamed per-chunk spatial max of r_f -----------------------------------
    n_chunks = 2 if (B == 1 and num_tiles >= 2) else 1   # megacore coverage at B == 1
    tpc = _cdiv(num_tiles, n_chunks)
    if n_chunks * tpc == num_tiles:
        hw_blk = lambda b, c, k: (b, 0, c * tpc + k)
    else:
        # uneven split: clamp so the spare step re-reads the last tile (max is idempotent)
        hw_blk = lambda b, c, k: (b, 0, jnp.minimum(c * tpc + k, num_tiles - 1))

    big3 = pl.BlockSpec((1, C, T), hw_blk)
    map3 = pl.BlockSpec((1, 1, T), hw_blk)

    pmax = pl.pallas_call(
        functools.partial(_rf_partial_max_kernel, hw=HW, tile_hw=T,
                          tiles_per_chunk=tpc, num_tiles=num_tiles, masked=pad > 0),
        out_shape=jax.ShapeDtypeStruct((B * n_chunks, C, 1), jnp.float32),
        grid=(B, n_chunks, tpc),
        in_specs=[big3, big3, map3],
        out_specs=pl.BlockSpec((1, C, 1), lambda b, c, k: (b * n_chunks + c, 0, 0)),
        compiler_params=_cp(("parallel", "parallel", "arbitrary")),
    )(r1f, r2f, saf)

    # ---- K3b: combine chunk maxes + fc1/relu/fc2/sigmoid ------------------------------
    r_ca = pl.pallas_call(
        _chan_fc_kernel,
        out_shape=jax.ShapeDtypeStruct((B, C), jnp.float32),
        in_specs=[pl.BlockSpec(memory_space=pltpu.MemorySpace.VMEM)] * 3,
        out_specs=pl.BlockSpec(memory_space=pltpu.MemorySpace.VMEM),
        compiler_params=pltpu.CompilerParams(vmem_limit_bytes=vmem_limit),
    )(pmax.reshape(B, n_chunks, C), ca_fc1_w.T, ca_fc2_w.T)

    # ---- K4: r_out = r_f * r_ca + r1 ---------------------------------------------------
    ca_bc = r_ca.astype(dtype)[:, :, None]               # (B, C, 1)
    out = pl.pallas_call(
        _combine_kernel,
        out_shape=jax.ShapeDtypeStruct((B, C, HW), dtype),
        grid=(B, num_tiles),
        in_specs=[big2, big2, map2,
                  pl.BlockSpec((1, C, 1), lambda b, k: (b, 0, 0))],
        out_specs=big2,
        compiler_params=_cp(("parallel", "parallel")),
    )(r1f, r2f, saf, ca_bc)

    return out.reshape(B, C, H, W)


# ---------------------------------------------------------------------------
# pure-JAX reference mirroring the PyTorch forward
# ---------------------------------------------------------------------------
def rfem_ref(r1, r2, ca_fc1_w, ca_fc2_w, sa_conv_w):
    K = sa_conv_w.shape[0]
    P = K // 2
    mul_fuse = r1 * r2
    cmax = jnp.max(mul_fuse, axis=1, keepdims=True)
    conv = jax.lax.conv_general_dilated(
        cmax, sa_conv_w[None, None, :, :], window_strides=(1, 1),
        padding=((P, P), (P, P)), dimension_numbers=("NCHW", "OIHW", "NCHW"))
    sa = jax.nn.sigmoid(conv)
    r_f = r1 + mul_fuse * sa
    pooled = jnp.max(r_f, axis=(2, 3))
    h = jnp.maximum(pooled @ ca_fc1_w.T, 0.0)
    r_ca = jax.nn.sigmoid(h @ ca_fc2_w.T)[:, :, None, None]
    return r_f * r_ca + r1


if __name__ == "__main__":
    key = jax.random.PRNGKey(0)

    def _check(B, C, H, W, tile_hw=None, seed_offset=0):
        ks = jax.random.split(jax.random.fold_in(key, seed_offset), 5)
        Ch = max(C // 16, 1)
        r1 = jax.random.normal(ks[0], (B, C, H, W), dtype=jnp.float32)
        r2 = jax.random.normal(ks[1], (B, C, H, W), dtype=jnp.float32)
        w1 = jax.random.normal(ks[2], (Ch, C), dtype=jnp.float32) * 0.1
        w2 = jax.random.normal(ks[3], (C, Ch), dtype=jnp.float32) * 0.1
        ws = jax.random.normal(ks[4], (7, 7), dtype=jnp.float32) * 0.1
        out = jax.block_until_ready(rfem_forward(r1, r2, w1, w2, ws, tile_hw=tile_hw))
        ref = rfem_ref(r1, r2, w1, w2, ws)
        assert out.shape == (B, C, H, W)
        err = jnp.max(jnp.abs(out - ref))
        assert jnp.allclose(out, ref, atol=2e-4, rtol=1e-4), \
            f"mismatch (B={B},C={C},H={H},W={W},T={tile_hw}): max abs err {err}"

    # multi-tile reduction (HW % T == 0, B=2 -> single chunk, unmasked fast path)
    _check(B=2, C=32, H=16, W=16, tile_hw=128, seed_offset=0)
    # B=1 -> chunked reduction for megacore; HW % T != 0 -> masked tail + edge blocks
    _check(B=1, C=32, H=20, W=13, seed_offset=1)
    # B=1 with an odd tile count -> uneven chunks (clamped index map, duplicate tile)
    _check(B=1, C=32, H=24, W=16, tile_hw=128, seed_offset=2)

    print("KERNEL_OK")
</pallas_src>

<mosaic_0001>
module attributes {stable_mosaic.version = 11 : i64} {
  func.func @_mul_chanmax_kernel(%arg0: i32, %arg1: i32, %arg2: memref<1x32x128xf32, #tpu.memory_space<vmem>>, %arg3: memref<1x32x128xf32, #tpu.memory_space<vmem>>, %arg4: memref<1x1x128xf32, #tpu.memory_space<vmem>>) attributes {dimension_semantics = [#tpu.dimension_semantics<parallel>, #tpu.dimension_semantics<parallel>], iteration_bounds = array<i64: 2, 2>, scalar_prefetch = 0 : i64, scratch_operands = 0 : i64, tpu.core_type = #tpu.core_type<tc>, window_params = [{transform_indices = @transform_0, window_bounds = array<i64: 1, 32, 128>}, {transform_indices = @transform_1, window_bounds = array<i64: 1, 32, 128>}, {transform_indices = @transform_2, window_bounds = array<i64: 1, 1, 128>}]} {
    %c0 = arith.constant 0 : index
    %c0_0 = arith.constant 0 : index
    %c0_1 = arith.constant 0 : index
    %0 = vector.load %arg2[%c0, %c0_0, %c0_1] : memref<1x32x128xf32, #tpu.memory_space<vmem>>, vector<1x32x128xf32>
    %c0_2 = arith.constant 0 : index
    %c0_3 = arith.constant 0 : index
    %c0_4 = arith.constant 0 : index
    %1 = vector.load %arg3[%c0_2, %c0_3, %c0_4] : memref<1x32x128xf32, #tpu.memory_space<vmem>>, vector<1x32x128xf32>
    %2 = arith.mulf %0, %1 : vector<1x32x128xf32>
    %cst = arith.constant dense<0xFF800000> : vector<1x128xf32>
    %3 = vector.multi_reduction <maximumf>, %2, %cst [1] : vector<1x32x128xf32> to vector<1x128xf32>
    %4 = vector.shape_cast %3 : vector<1x128xf32> to vector<1x1x128xf32>
    %c0_5 = arith.constant 0 : index
    %c0_6 = arith.constant 0 : index
    %c0_7 = arith.constant 0 : index
    %5 = vector.load %arg4[%c0_5, %c0_6, %c0_7] : memref<1x1x128xf32, #tpu.memory_space<vmem>>, vector<1x1x128xf32>
    tpu.vector_store %arg4[%c0_5, %c0_6, %c0_7], %4 {strides = array<i32>} : memref<1x1x128xf32, #tpu.memory_space<vmem>>, vector<1x1x128xf32>,
    return
  }
  func.func @transform_0(%arg0: i32, %arg1: i32) -> (i32, i32, i32) {
    %c0_i32 = arith.constant 0 : i32
    %c0_i32_0 = arith.constant 0 : i32
    return %arg0, %c0_i32, %arg1 : i32, i32, i32
  }
  func.func @transform_1(%arg0: i32, %arg1: i32) -> (i32, i32, i32) {
    %c0_i32 = arith.constant 0 : i32
    %c0_i32_0 = arith.constant 0 : i32
    return %arg0, %c0_i32, %arg1 : i32, i32, i32
  }
  func.func @transform_2(%arg0: i32, %arg1: i32) -> (i32, i32, i32) {
    %c0_i32 = arith.constant 0 : i32
    %c0_i32_0 = arith.constant 0 : i32
    return %arg0, %c0_i32, %arg1 : i32, i32, i32
  }
}

</mosaic_0001>

<llo_original>
// kernel: tpu_custom_call.1
$region0: #{tpu_custom_call.1}
  #allocation0 [shape = 'u32[]', space=smem, size = 0x4, offset = 0x4, fixed_abs, tag = 'smem constant byte address 0x4 - core index']
  #allocation1 [shape = 'u32[144,128]{1,0:T(1,128)}', space=vmem, size = 0x12000, scoped, tag = 'internal scratch']
  %s0 = inlined_call_operand.hbm [shape: f32[2,32,256], index: 0, kind: input, shape index: {}]
  %s1 = inlined_call_operand.hbm [shape: f32[2,32,256], index: 1, kind: input, shape index: {}]
  %s2 = inlined_call_operand.hbm [shape: f32[2,1,256], index: 2, kind: output, shape index: {}]
  %s3 = sld [smem:[#allocation0]]
  $region49: #{tpu_custom_call.1} parent=0
    _
  %s5 = ssub.s32 1, %s3
  %s6 = scalar_select 0, %s5, %s3
  $region1: #{tpu_custom_call.1} parent=0
    #allocation2 [shape = 'u8[32768]{0}', space=vmem, size = 0x8000, scoped, tag = 'input window, operand 0']
    #allocation3 [shape = 's32[2]{0}', space=sflag, size = 0x8, scoped, tag = 'scoped memory for tpu_custom_call.1']
    #allocation4 [shape = 's32[2]{0}', space=sflag, size = 0x8, scoped, tag = 'scoped memory for tpu_custom_call.1']
    #allocation5 [shape = 'u8[32768]{0}', space=vmem, size = 0x8000, scoped, tag = 'input window, operand 1']
    #allocation6 [shape = 's32[2]{0}', space=sflag, size = 0x8, scoped, tag = 'scoped memory for tpu_custom_call.1']
    #allocation7 [shape = 'u8[1024]{0}', space=vmem, size = 0x400, scoped, tag = 'output window, operand 0']
    %7 = vsyncpa [#allocation3], 0
    %s8 = scalar_lea.sflag [#allocation3], 1
    %9 = vsyncpa %s8, 0
    %10 = vsyncpa [#allocation6], 0
    %s11 = scalar_lea.sflag [#allocation6], 1
    %12 = vsyncpa %s11, 0
    %13 = vsyncpa [#allocation4], 0
    %s14 = scalar_lea.sflag [#allocation4], 1
    %15 = vsyncpa %s14, 0
    loop: start=0, step=1, limit=6
    $region2: #{tpu_custom_call.1} parent=1 // loop_pre_header
      _
    $region3: #{tpu_custom_call.1} parent=1 // loop_header
      %s17 = sphi 0, %s21
      %p18 = scmp.ge.s32.totalorder %s17, 6
      %s24 = sphi 0, %s36
      %s25 = sphi 0, %s32
      %s26 = sphi 0, %s24
      %s27 = sphi 0, %s25
      %s28 = sphi 0, %s26
      %s29 = sphi 0, %s27
      %s41 = sphi 0, %s43
      %s44 = sphi 0, %s41
      %s45 = sphi 0, %s44
      %s61 = sphi 0, %s45
      %s69 = sphi 0, %s71
      %s72 = sphi 0, %s69
      %s73 = sphi 0, %s72
      %s89 = sphi 0, %s73
      %s97 = sphi 0, %s99
      %s100 = sphi 0, %s97
      %s101 = sphi 0, %s100
      %s117 = sphi 0, %s101
    $region4: #{tpu_custom_call.1} parent=1 // loop_header_branch
      %20 = sbr.rel (%p18) target = $region8
    $region5: #{tpu_custom_call.1} parent=1 // loop_body
      %s22 = ssub.s32 %s17, 1
      %s23 = ssub.s32 %s17, 2
      %s30 = sadd.s32 1, %s25
      %p31 = scmp.ge.s32.totalorder %s30, 2
      %s32 = scalar_select %p31, 0, %s30
      %s33 = sadd.s32 1, %s24
      %s34 = scalar_select %p31, %s33, %s24
      %p35 = scmp.ge.s32.totalorder %s34, 2
      %s36 = scalar_select %p35, 0, %s34
      %s37 = ssub.s32 %s24, %s36
      %s38 = ssub.s32 %s25, %s32
      %s39 = sor.u32 %s37, %s38
      %p40 = scmp.eq.s32.totalorder %s39, 0
      %s42 = sadd.s32 %s41, 1
      %s43 = scalar_select %p40, %s41, %s42
      %p46 = pneg %p40
      %p47 = scmp.eq.s32.totalorder %s17, 3
      %p48 = por %p46, %p47
      %p49 = scmp.ne.s32.totalorder %s41, %s44
      %p50 = scmp.eq.s32.totalorder %s17, 0
      %p51 = por %p49, %p50
      %p52 = scmp.ne.s32.totalorder %s41, %s44
      %p53 = scmp.eq.s32.totalorder %s22, 3
      %p54 = por %p52, %p53
      %p55 = scmp.ne.s32.totalorder %s44, %s45
      %p56 = scmp.eq.s32.totalorder %s22, 0
      %p57 = por %p55, %p56
      %p58 = scmp.ne.s32.totalorder %s44, %s45
      %p59 = scmp.eq.s32.totalorder %s23, 3
      %p60 = por %p58, %p59
      %p62 = scmp.ne.s32.totalorder %s45, %s61
      %p63 = scmp.eq.s32.totalorder %s23, 0
      %p64 = por %p62, %p63
      %s65 = ssub.s32 %s24, %s36
      %s66 = ssub.s32 %s25, %s32
      %s67 = sor.u32 %s65, %s66
      %p68 = scmp.eq.s32.totalorder %s67, 0
      %s70 = sadd.s32 %s69, 1
      %s71 = scalar_select %p68, %s69, %s70
      %p74 = pneg %p68
      %p75 = scmp.eq.s32.totalorder %s17, 3
      %p76 = por %p74, %p75
      %p77 = scmp.ne.s32.totalorder %s69, %s72
      %p78 = scmp.eq.s32.totalorder %s17, 0
      %p79 = por %p77, %p78
      %p80 = scmp.ne.s32.totalorder %s69, %s72
      %p81 = scmp.eq.s32.totalorder %s22, 3
      %p82 = por %p80, %p81
      %p83 = scmp.ne.s32.totalorder %s72, %s73
      %p84 = scmp.eq.s32.totalorder %s22, 0
      %p85 = por %p83, %p84
      %p86 = scmp.ne.s32.totalorder %s72, %s73
      %p87 = scmp.eq.s32.totalorder %s23, 3
      %p88 = por %p86, %p87
      %p90 = scmp.ne.s32.totalorder %s73, %s89
      %p91 = scmp.eq.s32.totalorder %s23, 0
      %p92 = por %p90, %p91
      %s93 = ssub.s32 %s24, %s36
      %s94 = ssub.s32 %s25, %s32
      %s95 = sor.u32 %s93, %s94
      %p96 = scmp.eq.s32.totalorder %s95, 0
      %s98 = sadd.s32 %s97, 1
      %s99 = scalar_select %p96, %s97, %s98
      %p102 = pneg %p96
      %p103 = scmp.eq.s32.totalorder %s17, 3
      %p104 = por %p102, %p103
      %p105 = scmp.ne.s32.totalorder %s97, %s100
      %p106 = scmp.eq.s32.totalorder %s17, 0
      %p107 = por %p105, %p106
      %p108 = scmp.ne.s32.totalorder %s97, %s100
      %p109 = scmp.eq.s32.totalorder %s22, 3
      %p110 = por %p108, %p109
      %p111 = scmp.ne.s32.totalorder %s100, %s101
      %p112 = scmp.eq.s32.totalorder %s22, 0
      %p113 = por %p111, %p112
      %p114 = scmp.ne.s32.totalorder %s100, %s101
      %p115 = scmp.eq.s32.totalorder %s23, 3
      %p116 = por %p114, %p115
      %p118 = scmp.ne.s32.totalorder %s101, %s117
      %p119 = scmp.eq.s32.totalorder %s23, 0
      %p120 = por %p118, %p119
      %p121 = scmp.le.s32.totalorder 1, %s17
      %p122 = scmp.lt.s32.totalorder %s17, 5
      %p123 = pnand %p121, %p122
      %p124 = pneg %p123
      // Predicated region
      $region9: #{tpu_custom_call.1} parent=5 // pred_check
        _
      $region10: #{tpu_custom_call.1} parent=5 // pred_check_branch
        %126 = sbr.rel (%p123) target = $region12
      $region11: #{tpu_custom_call.1} parent=5 // pred_region
        %s127 = ssub.s32 %s17, 1
      $region12: #{tpu_custom_call.1} parent=5 // pred_fallthru
        _
      %p128 = scmp.lt.s32.totalorder %s17, 4
      // Predicated region
      $region13: #{tpu_custom_call.1} parent=5 // pred_check
        %p129 = pneg %p128
      $region14: #{tpu_custom_call.1} parent=5 // pred_check_branch
        %131 = sbr.rel (%p129) target = $region16
      $region15: #{tpu_custom_call.1} parent=5 // pred_region
        // Predicated region
        $region17: #{tpu_custom_call.1} parent=15 // pred_check
          %p132 = pneg %p51
        $region18: #{tpu_custom_call.1} parent=15 // pred_check_branch
          %134 = sbr.rel (%p132) target = $region20
        $region19: #{tpu_custom_call.1} parent=15 // pred_region
          %s135 = sand.u32 %s41, 1
          %s136 = scalar_lea.sflag [#allocation3], %s135
          %s137 = sand.u32 %s41, 1
          %s138 = smul.addr %s137, 32
          %s139 = scalar_lea.vmem [#allocation2], %s138
          %s141 = ssub.s32 512, 512
          %142 = vsyncadd %s136, %s141
          %s143 = smul.addr %s24, 8
          %s144 = sadd.s32 %s25, %s143
          %s145 = smul.addr %s144, 128
          %s146 = scalar_lea.hbm %s0, %s145
          %s147 = sshll.u32 %s139, 4
          %s148 = int_to_ptr.vmem [resolvable:$true] %s147
          %153 = dma.hbm_to_vmem [thread:$0]  %s146, 512, %s148, %s136, 256, 128, 8
        $region20: #{tpu_custom_call.1} parent=15 // pred_fallthru
          _
        // Predicated region
        $region21: #{tpu_custom_call.1} parent=15 // pred_check
          %p154 = pneg %p79
        $region22: #{tpu_custom_call.1} parent=15 // pred_check_branch
          %156 = sbr.rel (%p154) target = $region24
        $region23: #{tpu_custom_call.1} parent=15 // pred_region
          %s157 = sand.u32 %s69, 1
          %s158 = scalar_lea.sflag [#allocation6], %s157
          %s159 = sand.u32 %s69, 1
          %s160 = smul.addr %s159, 32
          %s161 = scalar_lea.vmem [#allocation5], %s160
          %s163 = ssub.s32 512, 512
          %164 = vsyncadd %s158, %s163
          %s165 = smul.addr %s24, 8
          %s166 = sadd.s32 %s25, %s165
          %s167 = smul.addr %s166, 128
          %s168 = scalar_lea.hbm %s1, %s167
          %s169 = sshll.u32 %s161, 4
          %s170 = int_to_ptr.vmem [resolvable:$true] %s169
          %175 = dma.hbm_to_vmem [thread:$0]  %s168, 512, %s170, %s158, 256, 128, 8
        $region24: #{tpu_custom_call.1} parent=15 // pred_fallthru
          _
      $region16: #{tpu_custom_call.1} parent=5 // pred_fallthru
        _
      %p176 = scmp.le.s32.totalorder 1, %s17
      %p177 = scmp.lt.s32.totalorder %s17, 5
      %p178 = pnand %p176, %p177
      %p179 = pneg %p178
      // Predicated region
      $region25: #{tpu_custom_call.1} parent=5 // pred_check
        _
      $region26: #{tpu_custom_call.1} parent=5 // pred_check_branch
        %181 = sbr.rel (%p178) target = $region28
      $region27: #{tpu_custom_call.1} parent=5 // pred_region
        %s182 = ssub.s32 %s17, 1
        %s183 = sand.u32 %s44, 1
        %s184 = scalar_lea.sflag [#allocation3], %s183
        %s185 = sand.u32 %s44, 1
        %s186 = smul.addr %s185, 32
        %s187 = scalar_lea.vmem [#allocation2], %s186
        // Predicated region
        $region29: #{tpu_custom_call.1} parent=27 // pred_check
          %p188 = pneg %p57
        $region30: #{tpu_custom_call.1} parent=27 // pred_check_branch
          %190 = sbr.rel (%p188) target = $region32
        $region31: #{tpu_custom_call.1} parent=27 // pred_region
          %191 = dma.done %s184, 512
        $region32: #{tpu_custom_call.1} parent=27 // pred_fallthru
          _
        %s192 = sand.u32 %s72, 1
        %s193 = scalar_lea.sflag [#allocation6], %s192
        %s194 = sand.u32 %s72, 1
        %s195 = smul.addr %s194, 32
        %s196 = scalar_lea.vmem [#allocation5], %s195
        // Predicated region
        $region33: #{tpu_custom_call.1} parent=27 // pred_check
          %p197 = pneg %p85
        $region34: #{tpu_custom_call.1} parent=27 // pred_check_branch
          %199 = sbr.rel (%p197) target = $region36
        $region35: #{tpu_custom_call.1} parent=27 // pred_region
          %200 = dma.done %s193, 512
        $region36: #{tpu_custom_call.1} parent=27 // pred_fallthru
          _
        %s201 = sand.u32 %s44, 1
        %s202 = scalar_lea.sflag [#allocation3], %s201
        %s203 = sand.u32 %s44, 1
        %s204 = smul.addr %s203, 32
        %s205 = scalar_lea.vmem [#allocation2], %s204
        %p206 = pneg %p57
        %p207 = pneg %p54
        %s208 = sand.u32 %s72, 1
        %s209 = scalar_lea.sflag [#allocation6], %s208
        %s210 = sand.u32 %s72, 1
        %s211 = smul.addr %s210, 32
        %s212 = scalar_lea.vmem [#allocation5], %s211
        %p213 = pneg %p85
        %p214 = pneg %p82
        %p215 = pneg %p113
        %p216 = pneg %p110
        %s217 = sand.u32 %s100, 1
        %s218 = scalar_lea.sflag [#allocation4], %s217
        %s219 = sand.u32 %s100, 1
        %s220 = scalar_lea.vmem [#allocation7], %s219
        %v221 = vld [vmem:[%s187] sm:$0xff]
        %v222 = vld [vmem:[%s187 + $0x8] sm:$0xff]
        %v223 = vld [vmem:[%s187 + $0x10] sm:$0xff]
        %v224 = vld [vmem:[%s187 + $0x18] sm:$0xff]
        %v225 = vld [vmem:[%s196] sm:$0xff]
        %v226 = vld [vmem:[%s196 + $0x8] sm:$0xff]
        %v227 = vld [vmem:[%s196 + $0x10] sm:$0xff]
        %v228 = vld [vmem:[%s196 + $0x18] sm:$0xff]
        %v229 = vmul.f32 %v221, %v225
        %v230 = vmul.f32 %v222, %v226
        %v231 = vmul.f32 %v223, %v227
        %v232 = vmul.f32 %v224, %v228
        %v233 = vmax.f32 %v229, %v230
        %v234 = vmax.f32 %v231, %v232
        %v235 = vmax.f32 %v233, %v234
        %v236 = vrot.slane %v235, 4
        %v237 = vmax.f32 %v235, %v236
        %v238 = vrot.slane %v237, 2
        %v239 = vmax.f32 %v237, %v238
        %v240 = vrot.slane %v239, 1
        %v241 = vmax.f32 %v239, %v240
        %242 = vst [vmem:[%s220] sm:$0x1] %v241
        %s243 = sand.u32 %s100, 1
        %s244 = scalar_lea.sflag [#allocation4], %s243
        %s245 = sand.u32 %s100, 1
        %s246 = scalar_lea.vmem [#allocation7], %s245
        // Predicated region
        $region37: #{tpu_custom_call.1} parent=27 // pred_check
          %p247 = pneg %p110
        $region38: #{tpu_custom_call.1} parent=27 // pred_check_branch
          %249 = sbr.rel (%p247) target = $region40
        $region39: #{tpu_custom_call.1} parent=27 // pred_region
          %s251 = ssub.s32 16, 16
          %252 = vsyncadd %s244, %s251
          %s253 = smul.addr %s26, 2
          %s254 = sadd.s32 %s27, %s253
          %s255 = smul.addr %s254, 16
          %s256 = scalar_lea.hbm %s2, %s255
          %s258 = sshll.u32 %s246, 4
          %s259 = int_to_ptr.vmem [resolvable:$true] %s258
          %261 = dma.vmem_to_hbm [thread:$0]  %s259, 16, %s256, %s244
        $region40: #{tpu_custom_call.1} parent=27 // pred_fallthru
          _
      $region28: #{tpu_custom_call.1} parent=5 // pred_fallthru
        _
      %p262 = scmp.le.s32.totalorder 2, %s17
      // Predicated region
      $region41: #{tpu_custom_call.1} parent=5 // pred_check
        %p263 = pneg %p262
      $region42: #{tpu_custom_call.1} parent=5 // pred_check_branch
        %265 = sbr.rel (%p263) target = $region44
      $region43: #{tpu_custom_call.1} parent=5 // pred_region
        %s266 = ssub.s32 %s17, 2
        // Predicated region
        $region45: #{tpu_custom_call.1} parent=43 // pred_check
          %p267 = pneg %p116
        $region46: #{tpu_custom_call.1} parent=43 // pred_check_branch
          %269 = sbr.rel (%p267) target = $region48
        $region47: #{tpu_custom_call.1} parent=43 // pred_region
          %s270 = sand.u32 %s101, 1
          %s271 = scalar_lea.sflag [#allocation4], %s270
          %s272 = sand.u32 %s101, 1
          %s273 = scalar_lea.vmem [#allocation7], %s272
          %274 = dma.done %s271, 16
        $region48: #{tpu_custom_call.1} parent=43 // pred_fallthru
          _
      $region44: #{tpu_custom_call.1} parent=5 // pred_fallthru
        _
    $region6: #{tpu_custom_call.1} parent=1 // loop_footer
      %s21 = sadd.s32 1, %s17
    $region7: #{tpu_custom_call.1} parent=1 // loop_footer_branch
      %16 = sbr.rel target = $region3
    $region8: #{tpu_custom_call.1} parent=1 // loop_exit
      _
    %275 = vsyncpa [#allocation3], 1
    %s276 = scalar_lea.sflag [#allocation3], 1
    %277 = vsyncpa %s276, 1
    %278 = vsyncpa [#allocation6], 1
    %s279 = scalar_lea.sflag [#allocation6], 1
    %280 = vsyncpa %s279, 1
    %281 = vsyncpa [#allocation4], 1
    %s282 = scalar_lea.sflag [#allocation4], 1
    %283 = vsyncpa %s282, 1

</llo_original>
